<compile_context>
chip_gen: v5e
topology: v5e:2x2
jax: 0.10.0
libtpu: 0.0.40
codegen_flags: <defaults>
</compile_context>

<pallas_src>
import jax
import jax.numpy as jnp
from jax.experimental import pallas as pl
from jax.experimental.pallas import tpu as pltpu


def _affine_kernel(gain_ref, bias_ref, x_ref, o_ref):
    # gain_ref / bias_ref: (1,) float32 scalars in SMEM.
    # x_ref / o_ref: (TM, 128) VMEM tiles.
    g = gain_ref[0]
    b = bias_ref[0]
    o_ref[...] = (x_ref[...] * g + b).astype(o_ref.dtype)


def affine(x: jax.Array, gain: jax.Array, bias: jax.Array) -> jax.Array:
    """y = x * gain + bias, with gain/bias scalar parameters of shape (1,)."""
    orig_shape = x.shape
    orig_dtype = x.dtype

    LANE = 128
    SUB = 8
    align = LANE * SUB  # 1024 elements

    flat = x.reshape(-1)
    n = flat.shape[0]

    pad = (-n) % align
    if pad:
        # Rare ragged-size fallback: costs one extra HBM pass over the input
        # (pad) and one over the output (slice). The common aligned case
        # (n % 1024 == 0, e.g. any NCHW tensor with H*W multiple of 1024 or
        # the shapes below) skips both copies entirely.
        flat = jnp.pad(flat, (0, pad))
    padded_n = n + pad
    rows = padded_n // LANE  # always a multiple of 8

    x2d = flat.reshape(rows, LANE)

    # ~2 MiB tiles, TM rounded to a multiple of 32 (covers f32/bf16/int8
    # sublane packing). Clamp to `rows` for small inputs (rows % 8 == 0).
    itemsize = jnp.dtype(orig_dtype).itemsize
    target_tile_bytes = 2 * 1024 * 1024
    tm = max(32, (target_tile_bytes // (LANE * itemsize)) // 32 * 32)
    tm = min(tm, rows)
    grid = (pl.cdiv(rows, tm),)

    out2d = pl.pallas_call(
        _affine_kernel,
        out_shape=jax.ShapeDtypeStruct((rows, LANE), orig_dtype),
        grid=grid,
        in_specs=[
            pl.BlockSpec(memory_space=pltpu.SMEM),          # gain (1,) f32
            pl.BlockSpec(memory_space=pltpu.SMEM),          # bias (1,) f32
            pl.BlockSpec((tm, LANE), lambda i: (i, 0)),     # x tile
        ],
        out_specs=pl.BlockSpec((tm, LANE), lambda i: (i, 0)),
        compiler_params=pltpu.CompilerParams(
            dimension_semantics=("parallel",),
        ),
    )(gain.astype(jnp.float32), bias.astype(jnp.float32), x2d)

    out_flat = out2d.reshape(-1)
    if pad:
        out_flat = out_flat[:n]
    return out_flat.reshape(orig_shape)


if __name__ == "__main__":
    key = jax.random.PRNGKey(0)

    # Parameters initialized like nn.Parameter(torch.ones(1)) / torch.zeros(1).
    gain = jnp.ones((1,), dtype=jnp.float32)
    bias = jnp.zeros((1,), dtype=jnp.float32)

    # NCHW input as the PyTorch module would receive (aligned fast path).
    x = jax.random.normal(key, (2, 4, 16, 16), dtype=jnp.float32)
    y = jax.block_until_ready(affine(x, gain, bias))
    ref = x * gain[0] + bias[0]
    assert y.shape == x.shape and y.dtype == x.dtype
    assert jnp.allclose(y, ref, atol=1e-6), "mismatch vs reference (aligned f32)"

    # Ragged-size fallback path with non-trivial gain/bias.
    gain2 = jnp.array([1.5], dtype=jnp.float32)
    bias2 = jnp.array([-0.25], dtype=jnp.float32)
    x2 = jax.random.normal(jax.random.PRNGKey(1), (3, 5, 7, 11), dtype=jnp.float32)
    y2 = jax.block_until_ready(affine(x2, gain2, bias2))
    ref2 = x2 * gain2[0] + bias2[0]
    assert y2.shape == x2.shape and y2.dtype == x2.dtype
    assert jnp.allclose(y2, ref2, atol=1e-6), "mismatch vs reference (ragged f32)"

    print("KERNEL_OK")
</pallas_src>

<mosaic_0001>
module attributes {stable_mosaic.version = 11 : i64} {
  func.func @_affine_kernel(%arg0: i32, %arg1: memref<1xf32, #tpu.memory_space<smem>>, %arg2: memref<1xf32, #tpu.memory_space<smem>>, %arg3: memref<16x128xf32, #tpu.memory_space<vmem>>, %arg4: memref<16x128xf32, #tpu.memory_space<vmem>>) attributes {dimension_semantics = [#tpu.dimension_semantics<parallel>], iteration_bounds = array<i64: 1>, scalar_prefetch = 0 : i64, scratch_operands = 0 : i64, tpu.core_type = #tpu.core_type<tc>, window_params = [{transform_indices = @transform_0, window_bounds = array<i64: 1>}, {transform_indices = @transform_1, window_bounds = array<i64: 1>}, {transform_indices = @transform_2, window_bounds = array<i64: 16, 128>}, {transform_indices = @transform_3, window_bounds = array<i64: 16, 128>}]} {
    %c0 = arith.constant 0 : index
    %0 = memref.load %arg1[%c0] : memref<1xf32, #tpu.memory_space<smem>>
    %c0_0 = arith.constant 0 : index
    %1 = memref.load %arg2[%c0_0] : memref<1xf32, #tpu.memory_space<smem>>
    %c0_1 = arith.constant 0 : index
    %c0_2 = arith.constant 0 : index
    %2 = vector.load %arg3[%c0_1, %c0_2] : memref<16x128xf32, #tpu.memory_space<vmem>>, vector<16x128xf32>
    %3 = vector.broadcast %0 : f32 to vector<16x128xf32>
    %4 = arith.mulf %2, %3 : vector<16x128xf32>
    %5 = vector.broadcast %1 : f32 to vector<16x128xf32>
    %6 = arith.addf %4, %5 : vector<16x128xf32>
    %c0_3 = arith.constant 0 : index
    %c0_4 = arith.constant 0 : index
    %7 = vector.load %arg4[%c0_3, %c0_4] : memref<16x128xf32, #tpu.memory_space<vmem>>, vector<16x128xf32>
    tpu.vector_store %arg4[%c0_3, %c0_4], %6 {strides = array<i32>} : memref<16x128xf32, #tpu.memory_space<vmem>>, vector<16x128xf32>,
    return
  }
  func.func @transform_0(%arg0: i32) -> i32 {
    %c0_i32 = arith.constant 0 : i32
    %c0_i32_0 = arith.constant 0 : i32
    return %c0_i32 : i32
  }
  func.func @transform_1(%arg0: i32) -> i32 {
    %c0_i32 = arith.constant 0 : i32
    %c0_i32_0 = arith.constant 0 : i32
    return %c0_i32 : i32
  }
  func.func @transform_2(%arg0: i32) -> (i32, i32) {
    %c0_i32 = arith.constant 0 : i32
    %c0_i32_0 = arith.constant 0 : i32
    return %arg0, %c0_i32 : i32, i32
  }
  func.func @transform_3(%arg0: i32) -> (i32, i32) {
    %c0_i32 = arith.constant 0 : i32
    %c0_i32_0 = arith.constant 0 : i32
    return %arg0, %c0_i32 : i32, i32
  }
}

</mosaic_0001>

<llo_original>
// kernel: tpu_custom_call.1
$region0: #{tpu_custom_call.1}
  #allocation0 [shape = 'u32[]', space=smem, size = 0x4, offset = 0x4, fixed_abs, tag = 'smem constant byte address 0x4 - core index']
  #allocation1 [shape = 'u32[72,128]{1,0:T(1,128)}', space=vmem, size = 0x9000, scoped, tag = 'internal scratch']
  #allocation2 [shape = 'f32[1]{0:T(128)S(6)}', space=smem, size = 0x200, scoped, tag = 'scoped memory for tpu_custom_call.1']
  #allocation3 [shape = 'f32[1]{0:T(128)S(6)}', space=smem, size = 0x200, scoped, tag = 'scoped memory for tpu_custom_call.1']
  %s0 = inlined_call_operand.<no memory space> [shape: f32[1], index: 0, kind: input, shape index: {}]
  %s1 = inlined_call_operand.<no memory space> [shape: f32[1], index: 1, kind: input, shape index: {}]
  %s2 = inlined_call_operand.hbm [shape: f32[16,128], index: 2, kind: input, shape index: {}]
  %s3 = inlined_call_operand.hbm [shape: f32[16,128], index: 3, kind: output, shape index: {}]
  %s4 = sld [smem:[#allocation0]]
  $region26: #{tpu_custom_call.1} parent=0
    _
  %s6 = ssub.s32 1, %s4
  %s7 = scalar_select 0, %s6, %s4
  %8 = sst [smem:[#allocation2]] %s0
  %9 = sst [smem:[#allocation3]] %s1
  $region1: #{tpu_custom_call.1} parent=0
    #allocation4 [shape = 'u8[8192]{0}', space=vmem, size = 0x2000, scoped, tag = 'input window, operand 2, single buffered']
    #allocation5 [shape = 's32[1]{0}', space=sflag, size = 0x4, scoped, tag = 'scoped memory for tpu_custom_call.1']
    #allocation6 [shape = 's32[1]{0}', space=sflag, size = 0x4, scoped, tag = 'scoped memory for tpu_custom_call.1']
    #allocation7 [shape = 'u8[8192]{0}', space=vmem, size = 0x2000, scoped, tag = 'output window, operand 0, single buffered']
    %10 = vsyncpa [#allocation5], 0
    %11 = vsyncpa [#allocation6], 0
    // Predicated region
    $region2: #{tpu_custom_call.1} parent=1 // pred_check
      _
    $region3: #{tpu_custom_call.1} parent=1 // pred_check_branch
      %13 = sbr.rel (0) target = $region5
    $region4: #{tpu_custom_call.1} parent=1 // pred_region
      _
    $region5: #{tpu_custom_call.1} parent=1 // pred_fallthru
      _
    // Predicated region
    $region6: #{tpu_custom_call.1} parent=1 // pred_check
      _
    $region7: #{tpu_custom_call.1} parent=1 // pred_check_branch
      %15 = sbr.rel (0) target = $region9
    $region8: #{tpu_custom_call.1} parent=1 // pred_region
      _
    $region9: #{tpu_custom_call.1} parent=1 // pred_fallthru
      _
    // Predicated region
    $region10: #{tpu_custom_call.1} parent=1 // pred_check
      _
    $region11: #{tpu_custom_call.1} parent=1 // pred_check_branch
      %17 = sbr.rel (0) target = $region13
    $region12: #{tpu_custom_call.1} parent=1 // pred_region
      %19 = vsyncadd [#allocation5], 0
      %s20 = sshll.u32 %s2, 4
      %s21 = int_to_ptr.hbm [resolvable:$true] %s20
      %s22 = sshll.u32 [#allocation4], 4
      %s23 = int_to_ptr.vmem [resolvable:$true] %s22
      %28 = dma.hbm_to_vmem [thread:$0]  %s21, 256, %s23, [#allocation5], 128, 128, 8
    $region13: #{tpu_custom_call.1} parent=1 // pred_fallthru
      _
    // Predicated region
    $region14: #{tpu_custom_call.1} parent=1 // pred_check
      _
    $region15: #{tpu_custom_call.1} parent=1 // pred_check_branch
      %30 = sbr.rel (0) target = $region17
    $region16: #{tpu_custom_call.1} parent=1 // pred_region
      %32 = dma.done [#allocation5], 256
    $region17: #{tpu_custom_call.1} parent=1 // pred_fallthru
      _
    %s33 = sld [smem:[#allocation2]]
    %s34 = sld [smem:[#allocation3]]
    %v35 = vld [vmem:[#allocation4] sm:$0xff]
    %v36 = vld [vmem:[#allocation4 + $0x8] sm:$0xff]
    %v37 = vstv %s33
    %v38 = vmul.f32 %v35, %v37
    %v39 = vmul.f32 %v36, %v37
    %v40 = vstv %s34
    %v41 = vadd.f32 %v38, %v40
    %v42 = vadd.f32 %v39, %v40
    %43 = vst [vmem:[#allocation7] sm:$0xff] %v41
    %44 = vst [vmem:[#allocation7 + $0x8] sm:$0xff] %v42
    // Predicated region
    $region18: #{tpu_custom_call.1} parent=1 // pred_check
      _
    $region19: #{tpu_custom_call.1} parent=1 // pred_check_branch
      %46 = sbr.rel (0) target = $region21
    $region20: #{tpu_custom_call.1} parent=1 // pred_region
      %48 = vsyncadd [#allocation6], 0
      %s49 = sshll.u32 [#allocation7], 4
      %s50 = int_to_ptr.vmem [resolvable:$true] %s49
      %s51 = sshll.u32 %s3, 4
      %s52 = int_to_ptr.hbm [resolvable:$true] %s51
      %57 = dma.vmem_to_hbm [thread:$0]  %s50, 256, %s52, [#allocation6], 128, 128, 8
    $region21: #{tpu_custom_call.1} parent=1 // pred_fallthru
      _
    // Predicated region
    $region22: #{tpu_custom_call.1} parent=1 // pred_check
      _
    $region23: #{tpu_custom_call.1} parent=1 // pred_check_branch
      %59 = sbr.rel (0) target = $region25
    $region24: #{tpu_custom_call.1} parent=1 // pred_region
      %61 = dma.done [#allocation6], 256
    $region25: #{tpu_custom_call.1} parent=1 // pred_fallthru
      _
    %62 = vsyncpa [#allocation5], 1
    %63 = vsyncpa [#allocation6], 1

</llo_original>
